<compile_context>
chip_gen: v6e
topology: v6e:2x2x1
jax: 0.10.0
libtpu: 0.0.40
codegen_flags: <defaults>
</compile_context>

<pallas_src>
import functools

import jax
import jax.numpy as jnp
from jax.experimental import pallas as pl
from jax.experimental.pallas import tpu as pltpu


def _round_up(v, m):
    return ((v + m - 1) // m) * m


def _gated_attn_kernel(x_ref, wab_ref, bab_ref, wc_ref, bc_ref, out_ref, *,
                       d_pad, c_rows):
    x = x_ref[...]                                                  # (tile_n, L)
    # Stage 1: one fused (tile_n, L) @ (L, 2*d_pad) MXU matmul for both the
    # tanh and sigmoid branches; f32 accumulation regardless of input dtype.
    ab = jnp.dot(x, wab_ref[...], preferred_element_type=jnp.float32)
    ab = ab + bab_ref[...]                                          # bias broadcast
    # d_pad is a multiple of 128 -> this split is lane-tile aligned (free).
    a = jnp.tanh(ab[:, :d_pad])                                     # EUP, f32
    b = jax.nn.sigmoid(ab[:, d_pad:])                               # EUP, f32
    gated = (a * b).astype(wc_ref.dtype)                            # (tile_n, d_pad)
    # Stage 2: (tile_n, d_pad) @ (d_pad, c_lane); c_lane is the 128-padded
    # n_classes so the MXU stays on full lane tiles.
    out = jnp.dot(gated, wc_ref[...], preferred_element_type=jnp.float32)
    out = out + bc_ref[...]                                         # (tile_n, c_lane)
    # Transpose so instances land on lanes; only c_rows (<= 8 for C=1) sublanes
    # are written back instead of a 128-lane padded slab.
    out_t = out.T                                                   # XLU transpose
    out_ref[...] = out_t[:c_rows, :].astype(out_ref.dtype)


def _choose_tile_n(n, l, itemsize):
    """Pick a row tile: ~4 MiB of x per step, >=4 grid steps when possible."""
    target_bytes = 4 << 20
    t = max(target_bytes // max(l * itemsize, 1), 128)
    t = min(t, 2048)
    # Keep at least ~4 grid steps (pipelining + both v7x TensorCores).
    t = min(t, max(pl.cdiv(n, 4), 128))
    t = max((t // 128) * 128, 128)   # multiple of 128: lane dim of transposed out
    return t


def attn_net_gated(x, wa, ba, wb, bb, wc, bc, *, tile_n=None):
    """Returns (A, x) matching the PyTorch module's forward (dropout=False)."""
    n, l = x.shape
    d = wa.shape[1]
    c = wc.shape[1]

    d_pad = _round_up(d, 128)       # lane-pad hidden dim for aligned split
    c_lane = _round_up(c, 128)      # lane-pad n_classes for the MXU output
    c_rows = _round_up(c, 8)        # sublane-pad n_classes for the writeback

    # Never cast x (a standalone cast would add HBM traffic); match weights to
    # x's dtype only when x is already bf16 upstream.
    w_dtype = jnp.bfloat16 if x.dtype == jnp.bfloat16 else jnp.float32

    # --- wrapper-side packing / zero-padding (tiny, one-time XLA ops) ---
    wab = jnp.zeros((l, 2 * d_pad), w_dtype)
    wab = wab.at[:, :d].set(wa.astype(w_dtype))
    wab = wab.at[:, d_pad:d_pad + d].set(wb.astype(w_dtype))
    bab = jnp.zeros((1, 2 * d_pad), jnp.float32)
    bab = bab.at[:, :d].set(ba.astype(jnp.float32))
    bab = bab.at[:, d_pad:d_pad + d].set(bb.astype(jnp.float32))
    wc_p = jnp.zeros((d_pad, c_lane), w_dtype).at[:d, :c].set(wc.astype(w_dtype))
    bc_p = jnp.zeros((1, c_lane), jnp.float32).at[:, :c].set(bc.astype(jnp.float32))

    itemsize = jnp.dtype(x.dtype).itemsize
    if tile_n is None:
        tile_n = _choose_tile_n(n, l, itemsize)
    if tile_n >= n:
        tile_n = n                              # single tile: block == full array dims
    else:
        tile_n = max((tile_n // 128) * 128, 128)  # lane dim of transposed output
    grid = (pl.cdiv(n, tile_n),)

    # VMEM budget: double-buffered x + output tiles, weights counted twice
    # (conservative, in case the Buffered(1) request is not honored), 1.5x headroom,
    # clamped to 75% of this generation's VMEM capacity.
    w_itemsize = jnp.dtype(w_dtype).itemsize
    vmem_bytes = (2 * tile_n * l * itemsize
                  + 2 * c_rows * tile_n * 4
                  + 2 * (l * 2 * d_pad + d_pad * c_lane) * w_itemsize
                  + 2 * (2 * d_pad + c_lane) * 4)
    try:
        vmem_cap = int(pltpu.get_tpu_info().vmem_capacity_bytes)
    except Exception:
        vmem_cap = 64 << 20                     # v7x per-TC capacity (safe floor)
    vmem_limit = int(min(max(int(1.5 * vmem_bytes), 32 << 20), int(0.75 * vmem_cap)))

    kernel = functools.partial(_gated_attn_kernel, d_pad=d_pad, c_rows=c_rows)

    def _specs(weight_pipeline_mode):
        kw = {} if weight_pipeline_mode is None else {
            "pipeline_mode": weight_pipeline_mode}
        in_specs = [
            pl.BlockSpec((tile_n, l), lambda i: (i, 0)),             # x: streams over N
            pl.BlockSpec((l, 2 * d_pad), lambda i: (0, 0), **kw),    # Wa|Wb: resident
            pl.BlockSpec((1, 2 * d_pad), lambda i: (0, 0), **kw),    # ba|bb: resident
            pl.BlockSpec((d_pad, c_lane), lambda i: (0, 0), **kw),   # Wc: resident
            pl.BlockSpec((1, c_lane), lambda i: (0, 0), **kw),       # bc: resident
        ]
        out_specs = pl.BlockSpec((c_rows, tile_n), lambda i: (0, i))  # transposed out
        return in_specs, out_specs

    def _call(in_specs, out_specs):
        return pl.pallas_call(
            kernel,
            out_shape=jax.ShapeDtypeStruct((c_rows, n), jnp.float32),
            grid=grid,
            in_specs=in_specs,
            out_specs=out_specs,
            compiler_params=pltpu.CompilerParams(
                dimension_semantics=("parallel",),
                vmem_limit_bytes=vmem_limit,
            ),
        )(x, wab, bab, wc_p, bc_p)

    try:
        # Invariant operands: single-buffered (constant index_map) -> frees VMEM.
        a_t = _call(*_specs(pl.Buffered(1)))
    except Exception:
        # Fallback if this Pallas build rejects Buffered(1) on the top-level grid.
        a_t = _call(*_specs(None))

    return a_t[:c, :].T, x


def _init_params(key, L, D, n_classes):
    # Deterministic synthetic init (roughly PyTorch Linear-style uniform).
    ks = jax.random.split(key, 6)
    lim_a = 1.0 / jnp.sqrt(L)
    lim_c = 1.0 / jnp.sqrt(D)
    wa = jax.random.uniform(ks[0], (L, D), jnp.float32, -lim_a, lim_a)
    ba = jax.random.uniform(ks[1], (1, D), jnp.float32, -lim_a, lim_a)
    wb = jax.random.uniform(ks[2], (L, D), jnp.float32, -lim_a, lim_a)
    bb = jax.random.uniform(ks[3], (1, D), jnp.float32, -lim_a, lim_a)
    wc = jax.random.uniform(ks[4], (D, n_classes), jnp.float32, -lim_c, lim_c)
    bc = jax.random.uniform(ks[5], (1, n_classes), jnp.float32, -lim_c, lim_c)
    return wa, ba, wb, bb, wc, bc


def _reference(x, wa, ba, wb, bb, wc, bc):
    a = jnp.tanh(x @ wa + ba)
    b = jax.nn.sigmoid(x @ wb + bb)
    return (a * b) @ wc + bc


if __name__ == "__main__":
    key = jax.random.PRNGKey(0)

    # --- test 1: small shapes, single tile (whole bag fits one grid step) ---
    N, L, D, C = 8, 32, 16, 1
    k_x, k_p, key = jax.random.split(key, 3)
    x = jax.random.normal(k_x, (N, L), jnp.float32)
    params = _init_params(k_p, L, D, C)

    A, x_out = attn_net_gated(x, *params)
    jax.block_until_ready((A, x_out))

    A_ref = _reference(x, *params)
    assert A.shape == (N, C)
    assert x_out.shape == (N, L)
    assert jnp.allclose(A, A_ref, atol=1e-5, rtol=1e-5)
    assert jnp.array_equal(x_out, x)

    # --- test 2: multi-tile grid with a ragged last block (exercises the
    #             streaming/pipelined path and the transposed writeback) ---
    N2, L2, D2, C2 = 300, 128, 64, 3
    k_x2, k_p2 = jax.random.split(key)
    x2 = jax.random.normal(k_x2, (N2, L2), jnp.float32)
    params2 = _init_params(k_p2, L2, D2, C2)

    A2, x2_out = attn_net_gated(x2, *params2, tile_n=128)
    jax.block_until_ready((A2, x2_out))

    A2_ref = _reference(x2, *params2)
    assert A2.shape == (N2, C2)
    assert jnp.allclose(A2, A2_ref, atol=1e-5, rtol=1e-5)
    assert jnp.array_equal(x2_out, x2)

    print("KERNEL_OK")
</pallas_src>

<mosaic_0001>
module attributes {stable_mosaic.version = 11 : i64} {
  func.func @_gated_attn_kernel(%arg0: i32, %arg1: memref<8x32xf32, #tpu.memory_space<vmem>>, %arg2: memref<32x256xf32, #tpu.memory_space<vmem>>, %arg3: memref<1x256xf32, #tpu.memory_space<vmem>>, %arg4: memref<128x128xf32, #tpu.memory_space<vmem>>, %arg5: memref<1x128xf32, #tpu.memory_space<vmem>>, %arg6: memref<8x8xf32, #tpu.memory_space<vmem>>) attributes {dimension_semantics = [#tpu.dimension_semantics<parallel>], iteration_bounds = array<i64: 1>, scalar_prefetch = 0 : i64, scratch_operands = 0 : i64, tpu.core_type = #tpu.core_type<tc>, window_params = [{transform_indices = @transform_0, window_bounds = array<i64: 8, 32>}, {pipeline_mode = #tpu.pipeline_mode<synchronous>, transform_indices = @transform_1, window_bounds = array<i64: 32, 256>}, {pipeline_mode = #tpu.pipeline_mode<synchronous>, transform_indices = @transform_2, window_bounds = array<i64: 1, 256>}, {pipeline_mode = #tpu.pipeline_mode<synchronous>, transform_indices = @transform_3, window_bounds = array<i64: 128, 128>}, {pipeline_mode = #tpu.pipeline_mode<synchronous>, transform_indices = @transform_4, window_bounds = array<i64: 1, 128>}, {transform_indices = @transform_5, window_bounds = array<i64: 8, 8>}]} {
    %c0 = arith.constant 0 : index
    %c0_0 = arith.constant 0 : index
    %0 = vector.load %arg1[%c0, %c0_0] : memref<8x32xf32, #tpu.memory_space<vmem>>, vector<8x32xf32>
    %c0_1 = arith.constant 0 : index
    %c0_2 = arith.constant 0 : index
    %1 = vector.load %arg2[%c0_1, %c0_2] : memref<32x256xf32, #tpu.memory_space<vmem>>, vector<32x256xf32>
    %cst = arith.constant dense<0.000000e+00> : vector<8x256xf32>
    %2 = tpu.matmul %0, %1, %cst {dimension_numbers = #tpu.dot_dimension_numbers<[1], [0], [0], [1], [0, 0, 1, 1], [], []>} : vector<8x32xf32>, vector<32x256xf32>, vector<8x256xf32> -> vector<8x256xf32>
    %c0_3 = arith.constant 0 : index
    %c0_4 = arith.constant 0 : index
    %3 = vector.load %arg3[%c0_3, %c0_4] : memref<1x256xf32, #tpu.memory_space<vmem>>, vector<1x256xf32>
    %4 = vector.broadcast %3 : vector<1x256xf32> to vector<8x256xf32>
    %5 = arith.addf %2, %4 : vector<8x256xf32>
    %6 = vector.extract_strided_slice %5 {offsets = [0, 0], sizes = [8, 128], strides = [1, 1]} : vector<8x256xf32> to vector<8x128xf32>
    %7 = math.tanh %6 : vector<8x128xf32>
    %8 = vector.extract_strided_slice %5 {offsets = [0, 128], sizes = [8, 128], strides = [1, 1]} : vector<8x256xf32> to vector<8x128xf32>
    %9 = arith.negf %8 : vector<8x128xf32>
    %10 = math.exp %9 : vector<8x128xf32>
    %cst_5 = arith.constant 1.000000e+00 : f32
    %11 = vector.broadcast %cst_5 : f32 to vector<8x128xf32>
    %12 = arith.addf %11, %10 : vector<8x128xf32>
    %13 = arith.divf %11, %12 : vector<8x128xf32>
    %14 = arith.mulf %7, %13 : vector<8x128xf32>
    %c0_6 = arith.constant 0 : index
    %c0_7 = arith.constant 0 : index
    %15 = vector.load %arg4[%c0_6, %c0_7] : memref<128x128xf32, #tpu.memory_space<vmem>>, vector<128x128xf32>
    %cst_8 = arith.constant dense<0.000000e+00> : vector<8x128xf32>
    %16 = tpu.matmul %14, %15, %cst_8 {dimension_numbers = #tpu.dot_dimension_numbers<[1], [0], [0], [1], [0, 0, 1, 1], [], []>} : vector<8x128xf32>, vector<128x128xf32>, vector<8x128xf32> -> vector<8x128xf32>
    %c0_9 = arith.constant 0 : index
    %c0_10 = arith.constant 0 : index
    %17 = vector.load %arg5[%c0_9, %c0_10] : memref<1x128xf32, #tpu.memory_space<vmem>>, vector<1x128xf32>
    %18 = vector.broadcast %17 : vector<1x128xf32> to vector<8x128xf32>
    %19 = arith.addf %16, %18 : vector<8x128xf32>
    %20 = tpu.transpose %19, [1, 0] : vector<8x128xf32> -> vector<128x8xf32>
    %21 = vector.extract_strided_slice %20 {offsets = [0, 0], sizes = [8, 8], strides = [1, 1]} : vector<128x8xf32> to vector<8x8xf32>
    %c0_11 = arith.constant 0 : index
    %c0_12 = arith.constant 0 : index
    %22 = vector.load %arg6[%c0_11, %c0_12] : memref<8x8xf32, #tpu.memory_space<vmem>>, vector<8x8xf32>
    tpu.vector_store %arg6[%c0_11, %c0_12], %21 {strides = array<i32>} : memref<8x8xf32, #tpu.memory_space<vmem>>, vector<8x8xf32>,
    return
  }
  func.func @transform_0(%arg0: i32) -> (i32, i32) {
    %c0_i32 = arith.constant 0 : i32
    %c0_i32_0 = arith.constant 0 : i32
    return %arg0, %c0_i32 : i32, i32
  }
  func.func @transform_1(%arg0: i32) -> (i32, i32) {
    %c0_i32 = arith.constant 0 : i32
    %c0_i32_0 = arith.constant 0 : i32
    %c0_i32_1 = arith.constant 0 : i32
    return %c0_i32, %c0_i32_0 : i32, i32
  }
  func.func @transform_2(%arg0: i32) -> (i32, i32) {
    %c0_i32 = arith.constant 0 : i32
    %c0_i32_0 = arith.constant 0 : i32
    %c0_i32_1 = arith.constant 0 : i32
    return %c0_i32, %c0_i32_0 : i32, i32
  }
  func.func @transform_3(%arg0: i32) -> (i32, i32) {
    %c0_i32 = arith.constant 0 : i32
    %c0_i32_0 = arith.constant 0 : i32
    %c0_i32_1 = arith.constant 0 : i32
    return %c0_i32, %c0_i32_0 : i32, i32
  }
  func.func @transform_4(%arg0: i32) -> (i32, i32) {
    %c0_i32 = arith.constant 0 : i32
    %c0_i32_0 = arith.constant 0 : i32
    %c0_i32_1 = arith.constant 0 : i32
    return %c0_i32, %c0_i32_0 : i32, i32
  }
  func.func @transform_5(%arg0: i32) -> (i32, i32) {
    %c0_i32 = arith.constant 0 : i32
    %c0_i32_0 = arith.constant 0 : i32
    return %c0_i32, %arg0 : i32, i32
  }
}

module attributes {stable_mosaic.version = 11 : i64} {
  func.func @_gated_attn_kernel(%arg0: i32, %arg1: memref<8x32xf32, #tpu.memory_space<vmem>>, %arg2: memref<32x256xf32, #tpu.memory_space<vmem>>, %arg3: memref<1x256xf32, #tpu.memory_space<vmem>>, %arg4: memref<128x128xf32, #tpu.memory_space<vmem>>, %arg5: memref<1x128xf32, #tpu.memory_space<vmem>>, %arg6: memref<8x8xf32, #tpu.memory_space<vmem>>) attributes {dimension_semantics = [#tpu.dimension_semantics<parallel>], iteration_bounds = array<i64: 1>, scalar_prefetch = 0 : i64, scratch_operands = 0 : i64, tpu.core_type = #tpu.core_type<tc>, window_params = [{transform_indices = @transform_0, window_bounds = array<i64: 8, 32>}, {pipeline_mode = #tpu.pipeline_mode<synchronous>, transform_indices = @transform_1, window_bounds = array<i64: 32, 256>}, {pipeline_mode = #tpu.pipeline_mode<synchronous>, transform_indices = @transform_2, window_bounds = array<i64: 1, 256>}, {pipeline_mode = #tpu.pipeline_mode<synchronous>, transform_indices = @transform_3, window_bounds = array<i64: 128, 128>}, {pipeline_mode = #tpu.pipeline_mode<synchronous>, transform_indices = @transform_4, window_bounds = array<i64: 1, 128>}, {transform_indices = @transform_5, window_bounds = array<i64: 8, 8>}]} {
    %c0 = arith.constant 0 : index
    %c0_0 = arith.constant 0 : index
    %0 = vector.load %arg1[%c0, %c0_0] : memref<8x32xf32, #tpu.memory_space<vmem>>, vector<8x32xf32>
    %c0_1 = arith.constant 0 : index
    %c0_2 = arith.constant 0 : index
    %1 = vector.load %arg2[%c0_1, %c0_2] : memref<32x256xf32, #tpu.memory_space<vmem>>, vector<32x256xf32>
    %cst = arith.constant dense<0.000000e+00> : vector<8x256xf32>
    %2 = tpu.matmul %0, %1, %cst {dimension_numbers = #tpu.dot_dimension_numbers<[1], [0], [0], [1], [0, 0, 1, 1], [], []>} : vector<8x32xf32>, vector<32x256xf32>, vector<8x256xf32> -> vector<8x256xf32>
    %c0_3 = arith.constant 0 : index
    %c0_4 = arith.constant 0 : index
    %3 = vector.load %arg3[%c0_3, %c0_4] : memref<1x256xf32, #tpu.memory_space<vmem>>, vector<1x256xf32>
    %4 = vector.broadcast %3 : vector<1x256xf32> to vector<8x256xf32>
    %5 = arith.addf %2, %4 : vector<8x256xf32>
    %6 = vector.extract_strided_slice %5 {offsets = [0, 0], sizes = [8, 128], strides = [1, 1]} : vector<8x256xf32> to vector<8x128xf32>
    %7 = math.tanh %6 : vector<8x128xf32>
    %8 = vector.extract_strided_slice %5 {offsets = [0, 128], sizes = [8, 128], strides = [1, 1]} : vector<8x256xf32> to vector<8x128xf32>
    %9 = arith.negf %8 : vector<8x128xf32>
    %10 = math.exp %9 : vector<8x128xf32>
    %cst_5 = arith.constant 1.000000e+00 : f32
    %11 = vector.broadcast %cst_5 : f32 to vector<8x128xf32>
    %12 = arith.addf %11, %10 : vector<8x128xf32>
    %13 = arith.divf %11, %12 : vector<8x128xf32>
    %14 = arith.mulf %7, %13 : vector<8x128xf32>
    %c0_6 = arith.constant 0 : index
    %c0_7 = arith.constant 0 : index
    %15 = vector.load %arg4[%c0_6, %c0_7] : memref<128x128xf32, #tpu.memory_space<vmem>>, vector<128x128xf32>
    %cst_8 = arith.constant dense<0.000000e+00> : vector<8x128xf32>
    %16 = tpu.matmul %14, %15, %cst_8 {dimension_numbers = #tpu.dot_dimension_numbers<[1], [0], [0], [1], [0, 0, 1, 1], [], []>} : vector<8x128xf32>, vector<128x128xf32>, vector<8x128xf32> -> vector<8x128xf32>
    %c0_9 = arith.constant 0 : index
    %c0_10 = arith.constant 0 : index
    %17 = vector.load %arg5[%c0_9, %c0_10] : memref<1x128xf32, #tpu.memory_space<vmem>>, vector<1x128xf32>
    %18 = vector.broadcast %17 : vector<1x128xf32> to vector<8x128xf32>
    %19 = arith.addf %16, %18 : vector<8x128xf32>
    %20 = tpu.transpose %19, [1, 0] : vector<8x128xf32> -> vector<128x8xf32>
    %21 = vector.extract_strided_slice %20 {offsets = [0, 0], sizes = [8, 8], strides = [1, 1]} : vector<128x8xf32> to vector<8x8xf32>
    %c0_11 = arith.constant 0 : index
    %c0_12 = arith.constant 0 : index
    %22 = vector.load %arg6[%c0_11, %c0_12] : memref<8x8xf32, #tpu.memory_space<vmem>>, vector<8x8xf32>
    tpu.vector_store %arg6[%c0_11, %c0_12], %21 {strides = array<i32>} : memref<8x8xf32, #tpu.memory_space<vmem>>, vector<8x8xf32>,
    return
  }
  func.func @transform_0(%arg0: i32) -> (i32, i32) {
    %c0_i32 = arith.constant 0 : i32
    %c0_i32_0 = arith.constant 0 : i32
    return %arg0, %c0_i32 : i32, i32
  }
  func.func @transform_1(%arg0: i32) -> (i32, i32) {
    %c0_i32 = arith.constant 0 : i32
    %c0_i32_0 = arith.constant 0 : i32
    %c0_i32_1 = arith.constant 0 : i32
    return %c0_i32, %c0_i32_0 : i32, i32
  }
  func.func @transform_2(%arg0: i32) -> (i32, i32) {
    %c0_i32 = arith.constant 0 : i32
    %c0_i32_0 = arith.constant 0 : i32
    %c0_i32_1 = arith.constant 0 : i32
    return %c0_i32, %c0_i32_0 : i32, i32
  }
  func.func @transform_3(%arg0: i32) -> (i32, i32) {
    %c0_i32 = arith.constant 0 : i32
    %c0_i32_0 = arith.constant 0 : i32
    %c0_i32_1 = arith.constant 0 : i32
    return %c0_i32, %c0_i32_0 : i32, i32
  }
  func.func @transform_4(%arg0: i32) -> (i32, i32) {
    %c0_i32 = arith.constant 0 : i32
    %c0_i32_0 = arith.constant 0 : i32
    %c0_i32_1 = arith.constant 0 : i32
    return %c0_i32, %c0_i32_0 : i32, i32
  }
  func.func @transform_5(%arg0: i32) -> (i32, i32) {
    %c0_i32 = arith.constant 0 : i32
    %c0_i32_0 = arith.constant 0 : i32
    return %c0_i32, %arg0 : i32, i32
  }
}

</mosaic_0001>

<llo_original>
// kernel: tpu_custom_call.1
$region0: #{tpu_custom_call.1}
  #allocation0 [shape = 'u32[]', space=smem, size = 0x4, offset = 0x4, fixed_abs, tag = 'smem constant byte address 0x4 - core index']
  #allocation1 [shape = 'u32[144,128]{1,0:T(1,128)}', space=vmem, size = 0x12000, scoped, tag = 'internal scratch']
  %s0 = inlined_call_operand.hbm [shape: f32[8,32], index: 0, kind: input, shape index: {}]
  %s1 = inlined_call_operand.hbm [shape: f32[32,256], index: 1, kind: input, shape index: {}]
  %s2 = inlined_call_operand.vmem [shape: f32[1,256], index: 2, kind: input, shape index: {}]
  %s3 = inlined_call_operand.hbm [shape: f32[128,128], index: 3, kind: input, shape index: {}]
  %s4 = inlined_call_operand.vmem [shape: f32[1,128], index: 4, kind: input, shape index: {}]
  %s5 = inlined_call_operand.hbm [shape: f32[8,8], index: 5, kind: output, shape index: {}]
  %s6 = sld [smem:[#allocation0]]
  $region42: #{tpu_custom_call.1} parent=0
    _
  %s8 = ssub.s32 1, %s6
  %s9 = scalar_select 0, %s8, %s6
  $region1: #{tpu_custom_call.1} parent=0
    #allocation2 [shape = 'u8[4096]{0}', space=vmem, size = 0x1000, scoped, tag = 'input window, operand 0, single buffered']
    #allocation3 [shape = 's32[1]{0}', space=sflag, size = 0x4, scoped, tag = 'scoped memory for tpu_custom_call.1']
    #allocation4 [shape = 's32[1]{0}', space=sflag, size = 0x4, scoped, tag = 'scoped memory for tpu_custom_call.1']
    #allocation5 [shape = 'u8[32768]{0}', space=vmem, size = 0x8000, scoped, tag = 'input window, operand 1, single buffered']
    #allocation6 [shape = 's32[1]{0}', space=sflag, size = 0x4, scoped, tag = 'scoped memory for tpu_custom_call.1']
    #allocation7 [shape = 'u8[65536]{0}', space=vmem, size = 0x10000, scoped, tag = 'input window, operand 3, single buffered']
    #allocation8 [shape = 'u8[4096]{0}', space=vmem, size = 0x1000, scoped, tag = 'output window, operand 0, single buffered']
    %10 = vsyncpa [#allocation3], 0
    %11 = vsyncpa [#allocation6], 0
    %12 = vsyncpa [#allocation4], 0
    // Predicated region
    $region2: #{tpu_custom_call.1} parent=1 // pred_check
      _
    $region3: #{tpu_custom_call.1} parent=1 // pred_check_branch
      %14 = sbr.rel (0) target = $region5
    $region4: #{tpu_custom_call.1} parent=1 // pred_region
      %s16 = ssub.s32 128, 128
      %17 = vsyncadd [#allocation3], %s16
      %s19 = sshll.u32 [#allocation2], 4
      %s20 = int_to_ptr.vmem [resolvable:$true] %s19
      %22 = dma.hbm_to_vmem [thread:$0]  %s0, 128, %s20, [#allocation3]
    $region5: #{tpu_custom_call.1} parent=1 // pred_fallthru
      _
    // Predicated region
    $region6: #{tpu_custom_call.1} parent=1 // pred_check
      _
    $region7: #{tpu_custom_call.1} parent=1 // pred_check_branch
      %24 = sbr.rel (0) target = $region9
    $region8: #{tpu_custom_call.1} parent=1 // pred_region
      %s26 = ssub.s32 1024, 1024
      %27 = vsyncadd [#allocation6], %s26
      %s28 = sshll.u32 [#allocation5], 4
      %s29 = int_to_ptr.vmem [resolvable:$true] %s28
      %34 = dma.hbm_to_vmem [thread:$0]  %s1, 1024, %s29, [#allocation6], 256, 256, 16
    $region9: #{tpu_custom_call.1} parent=1 // pred_fallthru
      _
    // Predicated region
    $region10: #{tpu_custom_call.1} parent=1 // pred_check
      _
    $region11: #{tpu_custom_call.1} parent=1 // pred_check_branch
      %36 = sbr.rel (0) target = $region13
    $region12: #{tpu_custom_call.1} parent=1 // pred_region
      _
    $region13: #{tpu_custom_call.1} parent=1 // pred_fallthru
      _
    // Predicated region
    $region14: #{tpu_custom_call.1} parent=1 // pred_check
      _
    $region15: #{tpu_custom_call.1} parent=1 // pred_check_branch
      %38 = sbr.rel (0) target = $region17
    $region16: #{tpu_custom_call.1} parent=1 // pred_region
      %s40 = ssub.s32 2048, 2048
      %41 = vsyncadd [#allocation6], %s40
      %s42 = sshll.u32 [#allocation7], 4
      %s43 = int_to_ptr.vmem [resolvable:$true] %s42
      %48 = dma.hbm_to_vmem [thread:$0]  %s3, 2048, %s43, [#allocation6], 128, 128, 8
    $region17: #{tpu_custom_call.1} parent=1 // pred_fallthru
      _
    // Predicated region
    $region18: #{tpu_custom_call.1} parent=1 // pred_check
      _
    $region19: #{tpu_custom_call.1} parent=1 // pred_check_branch
      %50 = sbr.rel (0) target = $region21
    $region20: #{tpu_custom_call.1} parent=1 // pred_region
      _
    $region21: #{tpu_custom_call.1} parent=1 // pred_fallthru
      _
    // Predicated region
    $region22: #{tpu_custom_call.1} parent=1 // pred_check
      _
    $region23: #{tpu_custom_call.1} parent=1 // pred_check_branch
      %52 = sbr.rel (0) target = $region25
    $region24: #{tpu_custom_call.1} parent=1 // pred_region
      %53 = dma.done [#allocation3], 128
    $region25: #{tpu_custom_call.1} parent=1 // pred_fallthru
      _
    // Predicated region
    $region26: #{tpu_custom_call.1} parent=1 // pred_check
      _
    $region27: #{tpu_custom_call.1} parent=1 // pred_check_branch
      %55 = sbr.rel (0) target = $region29
    $region28: #{tpu_custom_call.1} parent=1 // pred_region
      %56 = dma.done [#allocation6], 1024
    $region29: #{tpu_custom_call.1} parent=1 // pred_fallthru
      _
    // Predicated region
    $region30: #{tpu_custom_call.1} parent=1 // pred_check
      _
    $region31: #{tpu_custom_call.1} parent=1 // pred_check_branch
      %58 = sbr.rel (0) target = $region33
    $region32: #{tpu_custom_call.1} parent=1 // pred_region
      %59 = dma.done [#allocation6], 2048
    $region33: #{tpu_custom_call.1} parent=1 // pred_fallthru
      _
    %v60 = vld [vmem:[#allocation2] sm:$0xff]
    %v61 = vld [vmem:[#allocation5] sm:$0xff]
    %v62 = vld [vmem:[#allocation5 + $0x8] sm:$0xff]
    %v63 = vld [vmem:[#allocation5 + $0x10] sm:$0xff]
    %v64 = vld [vmem:[#allocation5 + $0x18] sm:$0xff]
    %v65 = vld [vmem:[#allocation5 + $0x20] sm:$0xff]
    %v66 = vld [vmem:[#allocation5 + $0x28] sm:$0xff]
    %v67 = vld [vmem:[#allocation5 + $0x30] sm:$0xff]
    %v68 = vld [vmem:[#allocation5 + $0x38] sm:$0xff]
    %v69 = vld [vmem:[%s2] sm:$0x3]
    %v71 = vlaneseq
    %v72 = vshrl.u32 %v71, 7
    %v73 = vsub.s32 0, %v72
    %v74 = vrot.slane %v69, %v73
    %v75 = vlaneseq
    %v76 = vshrl.u32 %v75, 7
    %v77 = vsub.s32 1, %v76
    %v78 = vrot.slane %v69, %v77
    %vm81 = vcmask 261120
    %v83 = vsel %vm81, %v60, 0
    %85 = vmatprep.subr.mxu0 0.0
    %86 = vmatpush1.msra.mxu0 0.0
    %87 = vmatprep.subr.mxu0 0.0
    %88 = vmatpush1.msra.mxu0 0.0
    %89 = vmatprep.subr.mxu0 0.0
    %90 = vmatpush1.msra.mxu0 0.0
    %91 = vmatprep.subr.mxu0 0.0
    %92 = vmatpush1.msra.mxu0 0.0
    %93 = vmatprep.subr.mxu0 0.0
    %94 = vmatpush1.msra.mxu0 0.0
    %95 = vmatprep.subr.mxu0 0.0
    %96 = vmatpush1.msra.mxu0 0.0
    %97 = vmatprep.subr.mxu0 0.0
    %98 = vmatpush1.msra.mxu0 0.0
    %99 = vmatprep.subr.mxu0 0.0
    %100 = vmatpush1.msra.mxu0 0.0
    %101 = vmatprep.subr.mxu0 0.0
    %102 = vmatpush1.msra.mxu0 0.0
    %103 = vmatprep.subr.mxu0 0.0
    %104 = vmatpush1.msra.mxu0 0.0
    %105 = vmatprep.subr.mxu0 0.0
    %106 = vmatpush1.msra.mxu0 0.0
    %107 = vmatprep.subr.mxu0 0.0
    %108 = vmatpush1.msra.mxu0 0.0
    %109 = vmatprep.subr.mxu0 %v68
    %110 = vmatpush1.msra.mxu0 %v67
    %111 = vmatprep.subr.mxu0 %v66
    %112 = vmatpush1.msra.mxu0 %v65
    %113 = vmatprep.subr.mxu0 %v64
    %114 = vmatpush1.msra.mxu0 %v63
    %115 = vmatprep.subr.mxu0 %v62
    %116 = vmatpush1.msra.mxu0 %v61
    %117 = vmatprep.subr.mxu0 0.0
    %118 = vmatpush2.msra.mxu0 0.0
    %119 = vmatprep.subr.mxu0 0.0
    %120 = vmatpush2.msra.mxu0 0.0
    %121 = vmatprep.subr.mxu0 0.0
    %122 = vmatpush2.msra.mxu0 0.0
    %123 = vmatprep.subr.mxu0 0.0
    %124 = vmatpush2.msra.mxu0 0.0
    %125 = vmatprep.subr.mxu0 0.0
    %126 = vmatpush2.msra.mxu0 0.0
    %127 = vmatprep.subr.mxu0 0.0
    %128 = vmatpush2.msra.mxu0 0.0
    %129 = vmatprep.subr.mxu0 0.0
    %130 = vmatpush2.msra.mxu0 0.0
    %131 = vmatprep.subr.mxu0 0.0
    %132 = vmatpush2.msra.mxu0 0.0
    %133 = vmatprep.subr.mxu0 0.0
    %134 = vmatpush2.msra.mxu0 0.0
    %135 = vmatprep.subr.mxu0 0.0
    %136 = vmatpush2.msra.mxu0 0.0
    %137 = vmatprep.subr.mxu0 0.0
    %138 = vmatpush2.msra.mxu0 0.0
    %139 = vmatprep.subr.mxu0 0.0
    %140 = vmatpush2.msra.mxu0 0.0
    %141 = vmatprep.subr.mxu0 0.0
    %142 = vmatpush2.msra.mxu0 0.0
    %143 = vmatprep.subr.mxu0 0.0
    %144 = vmatpush2.msra.mxu0 0.0
    %145 = vmatprep.subr.mxu0 0.0
    %146 = vmatpush2.msra.mxu0 0.0
    %147 = vmatprep.subr.mxu0 0.0
    %148 = vmatpush2.msra.mxu0 0.0
    %149 = vmatprep.mubr.f32.mxu0 0.0
    %150 = vmatmul.mubr.f32.gmra.mxu0 %v83
    %v151 = vpop.f32.mrf.mxu0
    %v152 = vadd.f32 %v74, %v151
    %v153 = vpop.f32.mrf.mxu0
    %v154 = vadd.f32 %v78, %v153
    %155 = vdwg.mxu0
    %v156 = vtanh.pop %v152
    %v157 = vxor.u32 %v154, 2147483648
    %v158 = vmul.f32 %v157, 1.442695
    %v159 = vpow.pop %v158
    %v160 = vadd.f32 %v159, 1.0
    %v161 = vrcp.pop %v160
    %v162 = vmul.f32 1.0, %v161
    %v163 = vmul.f32 %v156, %v162
    %v164 = vld [vmem:[#allocation7] sm:$0xff]
    %v165 = vld [vmem:[#allocation7 + $0x8] sm:$0xff]
    %v166 = vld [vmem:[#allocation7 + $0x10] sm:$0xff]
    %v167 = vld [vmem:[#allocation7 + $0x18] sm:$0xff]
    %v168 = vld [vmem:[#allocation7 + $0x20] sm:$0xff]
    %v169 = vld [vmem:[#allocation7 + $0x28] sm:$0xff]
    %v170 = vld [vmem:[#allocation7 + $0x30] sm:$0xff]
    %v171 = vld [vmem:[#allocation7 + $0x38] sm:$0xff]
    %v172 = vld [vmem:[#allocation7 + $0x40] sm:$0xff]
    %v173 = vld [vmem:[#allocation7 + $0x48] sm:$0xff]
    %v174 = vld [vmem:[#allocation7 + $0x50] sm:$0xff]
    %v175 = vld [vmem:[#allocation7 + $0x58] sm:$0xff]
    %v176 = vld [vmem:[#allocation7 + $0x60] sm:$0xff]
    %v177 = vld [vmem:[#allocation7 + $0x68] sm:$0xff]
    %v178 = vld [vmem:[#allocation7 + $0x70] sm:$0xff]
    %v179 = vld [vmem:[#allocation7 + $0x78] sm:$0xff]
    %v180 = vld [vmem:[%s4] sm:$0x1]
    %v182 = vlaneseq
    %v183 = vshrl.u32 %v182, 7
    %v184 = vsub.s32 0, %v183
    %v185 = vrot.slane %v180, %v184
    %187 = vmatprep.subr.mxu0 0.0
    %188 = vmatpush1.msra.mxu0 %v179
    %189 = vmatprep.subr.mxu0 0.0
    %190 = vmatpush1.msra.mxu0 %v178
    %191 = vmatprep.subr.mxu0 0.0
    %192 = vmatpush1.msra.mxu0 %v177
    %193 = vmatprep.subr.mxu0 0.0
    %194 = vmatpush1.msra.mxu0 %v176
    %195 = vmatprep.subr.mxu0 0.0
    %196 = vmatpush1.msra.mxu0 %v175
    %197 = vmatprep.subr.mxu0 0.0
    %198 = vmatpush1.msra.mxu0 %v174
    %199 = vmatprep.subr.mxu0 0.0
    %200 = vmatpush1.msra.mxu0 %v173
    %201 = vmatprep.subr.mxu0 0.0
    %202 = vmatpush1.msra.mxu0 %v172
    %203 = vmatprep.subr.mxu0 0.0
    %204 = vmatpush1.msra.mxu0 %v171
    %205 = vmatprep.subr.mxu0 0.0
    %206 = vmatpush1.msra.mxu0 %v170
    %207 = vmatprep.subr.mxu0 0.0
    %208 = vmatpush1.msra.mxu0 %v169
    %209 = vmatprep.subr.mxu0 0.0
    %210 = vmatpush1.msra.mxu0 %v168
    %211 = vmatprep.subr.mxu0 0.0
    %212 = vmatpush1.msra.mxu0 %v167
    %213 = vmatprep.subr.mxu0 0.0
    %214 = vmatpush1.msra.mxu0 %v166
    %215 = vmatprep.subr.mxu0 0.0
    %216 = vmatpush1.msra.mxu0 %v165
    %217 = vmatprep.subr.mxu0 0.0
    %218 = vmatpush1.msra.mxu0 %v164
    %219 = vmatprep.subr.mxu0 0.0
    %220 = vmatpush2.msra.mxu0 0.0
    %221 = vmatprep.subr.mxu0 0.0
    %222 = vmatpush2.msra.mxu0 0.0
    %223 = vmatprep.subr.mxu0 0.0
    %224 = vmatpush2.msra.mxu0 0.0
    %225 = vmatprep.subr.mxu0 0.0
    %226 = vmatpush2.msra.mxu0 0.0
    %227 = vmatprep.subr.mxu0 0.0
    %228 = vmatpush2.msra.mxu0 0.0
    %229 = vmatprep.subr.mxu0 0.0
    %230 = vmatpush2.msra.mxu0 0.0
    %231 = vmatprep.subr.mxu0 0.0
    %232 = vmatpush2.msra.mxu0 0.0
    %233 = vmatprep.subr.mxu0 0.0
    %234 = vmatpush2.msra.mxu0 0.0
    %235 = vmatprep.subr.mxu0 0.0
    %236 = vmatpush2.msra.mxu0 0.0
    %237 = vmatprep.subr.mxu0 0.0
    %238 = vmatpush2.msra.mxu0 0.0
    %239 = vmatprep.subr.mxu0 0.0
    %240 = vmatpush2.msra.mxu0 0.0
    %241 = vmatprep.subr.mxu0 0.0
    %242 = vmatpush2.msra.mxu0 0.0
    %243 = vmatprep.subr.mxu0 0.0
    %244 = vmatpush2.msra.mxu0 0.0
    %245 = vmatprep.subr.mxu0 0.0
    %246 = vmatpush2.msra.mxu0 0.0
    %247 = vmatprep.subr.mxu0 0.0
    %248 = vmatpush2.msra.mxu0 0.0
    %249 = vmatprep.subr.mxu0 0.0
    %250 = vmatpush2.msra.mxu0 0.0
    %251 = vmatprep.mubr.f32.mxu0 0.0
    %252 = vmatmul.mubr.f32.gmra.mxu0 %v163
    %v253 = vpop.f32.mrf.mxu0
    %v254 = vadd.f32 %v185, %v253
    %v255 = vpop.f32.mrf.mxu0
    %256 = vdwg.mxu0
    %257 = vxpose.xlu0.b32.start [1/16] %v254, 128
    %258 = vxpose.xlu0.b32.cont [2/16] 0.0, 128
    %259 = vxpose.xlu0.b32.cont [3/16] 0.0, 128
    %260 = vxpose.xlu0.b32.cont [4/16] 0.0, 128
    %261 = vxpose.xlu0.b32.cont [5/16] 0.0, 128
    %262 = vxpose.xlu0.b32.cont [6/16] 0.0, 128
    %263 = vxpose.xlu0.b32.cont [7/16] 0.0, 128
    %264 = vxpose.xlu0.b32.cont [8/16] 0.0, 128
    %265 = vxpose.xlu0.b32.cont [9/16] 0.0, 128
    %266 = vxpose.xlu0.b32.cont [10/16] 0.0, 128
    %267 = vxpose.xlu0.b32.cont [11/16] 0.0, 128
    %268 = vxpose.xlu0.b32.cont [12/16] 0.0, 128
    %269 = vxpose.xlu0.b32.cont [13/16] 0.0, 128
    %270 = vxpose.xlu0.b32.cont [14/16] 0.0, 128
    %271 = vxpose.xlu0.b32.cont [15/16] 0.0, 128
    %272 = vxpose.xlu0.b32.end [16/16] 0.0, 128
    %v273 = vpop.trf.xlu0
    %v274 = vpop.trf.xlu0
    %v275 = vpop.trf.xlu0
    %v276 = vpop.trf.xlu0
    %v277 = vpop.trf.xlu0
    %v278 = vpop.trf.xlu0
    %v279 = vpop.trf.xlu0
    %v280 = vpop.trf.xlu0
    %v281 = vpop.trf.xlu0
    %v282 = vpop.trf.xlu0
    %v283 = vpop.trf.xlu0
    %v284 = vpop.trf.xlu0
    %v285 = vpop.trf.xlu0
    %v286 = vpop.trf.xlu0
    %v287 = vpop.trf.xlu0
    %v288 = vpop.trf.xlu0
    %vm289 = vcmask 64512
    %290 = vst.msk [vmem:[#allocation8] sm:$0xff] %vm289, %v273
    // Predicated region
    $region34: #{tpu_custom_call.1} parent=1 // pred_check
      _
    $region35: #{tpu_custom_call.1} parent=1 // pred_check_branch
      %292 = sbr.rel (0) target = $region37
    $region36: #{tpu_custom_call.1} parent=1 // pred_region
      %s294 = ssub.s32 128, 128
      %295 = vsyncadd [#allocation4], %s294
      %s297 = sshll.u32 [#allocation8], 4
      %s298 = int_to_ptr.vmem [resolvable:$true] %s297
      %300 = dma.vmem_to_hbm [thread:$0]  %s298, 128, %s5, [#allocation4]
    $region37: #{tpu_custom_call.1} parent=1 // pred_fallthru
      _
    // Predicated region
    $region38: #{tpu_custom_call.1} parent=1 // pred_check
      _
    $region39: #{tpu_custom_call.1} parent=1 // pred_check_branch
      %302 = sbr.rel (0) target = $region41
    $region40: #{tpu_custom_call.1} parent=1 // pred_region
      %303 = dma.done [#allocation4], 128
    $region41: #{tpu_custom_call.1} parent=1 // pred_fallthru
      _
    %304 = vsyncpa [#allocation3], 1
    %305 = vsyncpa [#allocation6], 1
    %306 = vsyncpa [#allocation4], 1

// kernel: tpu_custom_call.1
$region0: #{tpu_custom_call.1}
  #allocation0 [shape = 'u32[]', space=smem, size = 0x4, offset = 0x4, fixed_abs, tag = 'smem constant byte address 0x4 - core index']
  #allocation1 [shape = 'u32[144,128]{1,0:T(1,128)}', space=vmem, size = 0x12000, scoped, tag = 'internal scratch']
  %s0 = inlined_call_operand.hbm [shape: f32[8,32], index: 0, kind: input, shape index: {}]
  %s1 = inlined_call_operand.hbm [shape: f32[32,256], index: 1, kind: input, shape index: {}]
  %s2 = inlined_call_operand.vmem [shape: f32[1,256], index: 2, kind: input, shape index: {}]
  %s3 = inlined_call_operand.hbm [shape: f32[128,128], index: 3, kind: input, shape index: {}]
  %s4 = inlined_call_operand.vmem [shape: f32[1,128], index: 4, kind: input, shape index: {}]
  %s5 = inlined_call_operand.hbm [shape: f32[8,8], index: 5, kind: output, shape index: {}]
  %s6 = sld [smem:[#allocation0]]
  $region42: #{tpu_custom_call.1} parent=0
    _
  %s8 = ssub.s32 1, %s6
  %s9 = scalar_select 0, %s8, %s6
  $region1: #{tpu_custom_call.1} parent=0
    #allocation2 [shape = 'u8[4096]{0}', space=vmem, size = 0x1000, scoped, tag = 'input window, operand 0, single buffered']
    #allocation3 [shape = 's32[1]{0}', space=sflag, size = 0x4, scoped, tag = 'scoped memory for tpu_custom_call.1']
    #allocation4 [shape = 's32[1]{0}', space=sflag, size = 0x4, scoped, tag = 'scoped memory for tpu_custom_call.1']
    #allocation5 [shape = 'u8[32768]{0}', space=vmem, size = 0x8000, scoped, tag = 'input window, operand 1, single buffered']
    #allocation6 [shape = 's32[1]{0}', space=sflag, size = 0x4, scoped, tag = 'scoped memory for tpu_custom_call.1']
    #allocation7 [shape = 'u8[65536]{0}', space=vmem, size = 0x10000, scoped, tag = 'input window, operand 3, single buffered']
    #allocation8 [shape = 'u8[4096]{0}', space=vmem, size = 0x1000, scoped, tag = 'output window, operand 0, single buffered']
    %10 = vsyncpa [#allocation3], 0
    %11 = vsyncpa [#allocation6], 0
    %12 = vsyncpa [#allocation4], 0
    // Predicated region
    $region2: #{tpu_custom_call.1} parent=1 // pred_check
      _
    $region3: #{tpu_custom_call.1} parent=1 // pred_check_branch
      %14 = sbr.rel (0) target = $region5
    $region4: #{tpu_custom_call.1} parent=1 // pred_region
      %s16 = ssub.s32 128, 128
      %17 = vsyncadd [#allocation3], %s16
      %s19 = sshll.u32 [#allocation2], 4
      %s20 = int_to_ptr.vmem [resolvable:$true] %s19
      %22 = dma.hbm_to_vmem [thread:$0]  %s0, 128, %s20, [#allocation3]
    $region5: #{tpu_custom_call.1} parent=1 // pred_fallthru
      _
    // Predicated region
    $region6: #{tpu_custom_call.1} parent=1 // pred_check
      _
    $region7: #{tpu_custom_call.1} parent=1 // pred_check_branch
      %24 = sbr.rel (0) target = $region9
    $region8: #{tpu_custom_call.1} parent=1 // pred_region
      %s26 = ssub.s32 1024, 1024
      %27 = vsyncadd [#allocation6], %s26
      %s28 = sshll.u32 [#allocation5], 4
      %s29 = int_to_ptr.vmem [resolvable:$true] %s28
      %34 = dma.hbm_to_vmem [thread:$0]  %s1, 1024, %s29, [#allocation6], 256, 256, 16
    $region9: #{tpu_custom_call.1} parent=1 // pred_fallthru
      _
    // Predicated region
    $region10: #{tpu_custom_call.1} parent=1 // pred_check
      _
    $region11: #{tpu_custom_call.1} parent=1 // pred_check_branch
      %36 = sbr.rel (0) target = $region13
    $region12: #{tpu_custom_call.1} parent=1 // pred_region
      _
    $region13: #{tpu_custom_call.1} parent=1 // pred_fallthru
      _
    // Predicated region
    $region14: #{tpu_custom_call.1} parent=1 // pred_check
      _
    $region15: #{tpu_custom_call.1} parent=1 // pred_check_branch
      %38 = sbr.rel (0) target = $region17
    $region16: #{tpu_custom_call.1} parent=1 // pred_region
      %s40 = ssub.s32 2048, 2048
      %41 = vsyncadd [#allocation6], %s40
      %s42 = sshll.u32 [#allocation7], 4
      %s43 = int_to_ptr.vmem [resolvable:$true] %s42
      %48 = dma.hbm_to_vmem [thread:$0]  %s3, 2048, %s43, [#allocation6], 128, 128, 8
    $region17: #{tpu_custom_call.1} parent=1 // pred_fallthru
      _
    // Predicated region
    $region18: #{tpu_custom_call.1} parent=1 // pred_check
      _
    $region19: #{tpu_custom_call.1} parent=1 // pred_check_branch
      %50 = sbr.rel (0) target = $region21
    $region20: #{tpu_custom_call.1} parent=1 // pred_region
      _
    $region21: #{tpu_custom_call.1} parent=1 // pred_fallthru
      _
    // Predicated region
    $region22: #{tpu_custom_call.1} parent=1 // pred_check
      _
    $region23: #{tpu_custom_call.1} parent=1 // pred_check_branch
      %52 = sbr.rel (0) target = $region25
    $region24: #{tpu_custom_call.1} parent=1 // pred_region
      %53 = dma.done [#allocation3], 128
    $region25: #{tpu_custom_call.1} parent=1 // pred_fallthru
      _
    // Predicated region
    $region26: #{tpu_custom_call.1} parent=1 // pred_check
      _
    $region27: #{tpu_custom_call.1} parent=1 // pred_check_branch
      %55 = sbr.rel (0) target = $region29
    $region28: #{tpu_custom_call.1} parent=1 // pred_region
      %56 = dma.done [#allocation6], 1024
    $region29: #{tpu_custom_call.1} parent=1 // pred_fallthru
      _
    // Predicated region
    $region30: #{tpu_custom_call.1} parent=1 // pred_check
      _
    $region31: #{tpu_custom_call.1} parent=1 // pred_check_branch
      %58 = sbr.rel (0) target = $region33
    $region32: #{tpu_custom_call.1} parent=1 // pred_region
      %59 = dma.done [#allocation6], 2048
    $region33: #{tpu_custom_call.1} parent=1 // pred_fallthru
      _
    %v60 = vld [vmem:[#allocation2] sm:$0xff]
    %v61 = vld [vmem:[#allocation5] sm:$0xff]
    %v62 = vld [vmem:[#allocation5 + $0x8] sm:$0xff]
    %v63 = vld [vmem:[#allocation5 + $0x10] sm:$0xff]
    %v64 = vld [vmem:[#allocation5 + $0x18] sm:$0xff]
    %v65 = vld [vmem:[#allocation5 + $0x20] sm:$0xff]
    %v66 = vld [vmem:[#allocation5 + $0x28] sm:$0xff]
    %v67 = vld [vmem:[#allocation5 + $0x30] sm:$0xff]
    %v68 = vld [vmem:[#allocation5 + $0x38] sm:$0xff]
    %v69 = vld [vmem:[%s2] sm:$0x3]
    %v71 = vlaneseq
    %v72 = vshrl.u32 %v71, 7
    %v73 = vsub.s32 0, %v72
    %v74 = vrot.slane %v69, %v73
    %v75 = vlaneseq
    %v76 = vshrl.u32 %v75, 7
    %v77 = vsub.s32 1, %v76
    %v78 = vrot.slane %v69, %v77
    %vm81 = vcmask 261120
    %v83 = vsel %vm81, %v60, 0
    %85 = vmatprep.subr.mxu0 0.0
    %86 = vmatpush1.msra.mxu0 0.0
    %87 = vmatprep.subr.mxu0 0.0
    %88 = vmatpush1.msra.mxu0 0.0
    %89 = vmatprep.subr.mxu0 0.0
    %90 = vmatpush1.msra.mxu0 0.0
    %91 = vmatprep.subr.mxu0 0.0
    %92 = vmatpush1.msra.mxu0 0.0
    %93 = vmatprep.subr.mxu0 0.0
    %94 = vmatpush1.msra.mxu0 0.0
    %95 = vmatprep.subr.mxu0 0.0
    %96 = vmatpush1.msra.mxu0 0.0
    %97 = vmatprep.subr.mxu0 0.0
    %98 = vmatpush1.msra.mxu0 0.0
    %99 = vmatprep.subr.mxu0 0.0
    %100 = vmatpush1.msra.mxu0 0.0
    %101 = vmatprep.subr.mxu0 0.0
    %102 = vmatpush1.msra.mxu0 0.0
    %103 = vmatprep.subr.mxu0 0.0
    %104 = vmatpush1.msra.mxu0 0.0
    %105 = vmatprep.subr.mxu0 0.0
    %106 = vmatpush1.msra.mxu0 0.0
    %107 = vmatprep.subr.mxu0 0.0
    %108 = vmatpush1.msra.mxu0 0.0
    %109 = vmatprep.subr.mxu0 %v68
    %110 = vmatpush1.msra.mxu0 %v67
    %111 = vmatprep.subr.mxu0 %v66
    %112 = vmatpush1.msra.mxu0 %v65
    %113 = vmatprep.subr.mxu0 %v64
    %114 = vmatpush1.msra.mxu0 %v63
    %115 = vmatprep.subr.mxu0 %v62
    %116 = vmatpush1.msra.mxu0 %v61
    %117 = vmatprep.subr.mxu0 0.0
    %118 = vmatpush2.msra.mxu0 0.0
    %119 = vmatprep.subr.mxu0 0.0
    %120 = vmatpush2.msra.mxu0 0.0
    %121 = vmatprep.subr.mxu0 0.0
    %122 = vmatpush2.msra.mxu0 0.0
    %123 = vmatprep.subr.mxu0 0.0
    %124 = vmatpush2.msra.mxu0 0.0
    %125 = vmatprep.subr.mxu0 0.0
    %126 = vmatpush2.msra.mxu0 0.0
    %127 = vmatprep.subr.mxu0 0.0
    %128 = vmatpush2.msra.mxu0 0.0
    %129 = vmatprep.subr.mxu0 0.0
    %130 = vmatpush2.msra.mxu0 0.0
    %131 = vmatprep.subr.mxu0 0.0
    %132 = vmatpush2.msra.mxu0 0.0
    %133 = vmatprep.subr.mxu0 0.0
    %134 = vmatpush2.msra.mxu0 0.0
    %135 = vmatprep.subr.mxu0 0.0
    %136 = vmatpush2.msra.mxu0 0.0
    %137 = vmatprep.subr.mxu0 0.0
    %138 = vmatpush2.msra.mxu0 0.0
    %139 = vmatprep.subr.mxu0 0.0
    %140 = vmatpush2.msra.mxu0 0.0
    %141 = vmatprep.subr.mxu0 0.0
    %142 = vmatpush2.msra.mxu0 0.0
    %143 = vmatprep.subr.mxu0 0.0
    %144 = vmatpush2.msra.mxu0 0.0
    %145 = vmatprep.subr.mxu0 0.0
    %146 = vmatpush2.msra.mxu0 0.0
    %147 = vmatprep.subr.mxu0 0.0
    %148 = vmatpush2.msra.mxu0 0.0
    %149 = vmatprep.mubr.f32.mxu0 0.0
    %150 = vmatmul.mubr.f32.gmra.mxu0 %v83
    %v151 = vpop.f32.mrf.mxu0
    %v152 = vadd.f32 %v74, %v151
    %v153 = vpop.f32.mrf.mxu0
    %v154 = vadd.f32 %v78, %v153
    %155 = vdwg.mxu0
    %v156 = vtanh.pop %v152
    %v157 = vxor.u32 %v154, 2147483648
    %v158 = vmul.f32 %v157, 1.442695
    %v159 = vpow.pop %v158
    %v160 = vadd.f32 %v159, 1.0
    %v161 = vrcp.pop %v160
    %v162 = vmul.f32 1.0, %v161
    %v163 = vmul.f32 %v156, %v162
    %v164 = vld [vmem:[#allocation7] sm:$0xff]
    %v165 = vld [vmem:[#allocation7 + $0x8] sm:$0xff]
    %v166 = vld [vmem:[#allocation7 + $0x10] sm:$0xff]
    %v167 = vld [vmem:[#allocation7 + $0x18] sm:$0xff]
    %v168 = vld [vmem:[#allocation7 + $0x20] sm:$0xff]
    %v169 = vld [vmem:[#allocation7 + $0x28] sm:$0xff]
    %v170 = vld [vmem:[#allocation7 + $0x30] sm:$0xff]
    %v171 = vld [vmem:[#allocation7 + $0x38] sm:$0xff]
    %v172 = vld [vmem:[#allocation7 + $0x40] sm:$0xff]
    %v173 = vld [vmem:[#allocation7 + $0x48] sm:$0xff]
    %v174 = vld [vmem:[#allocation7 + $0x50] sm:$0xff]
    %v175 = vld [vmem:[#allocation7 + $0x58] sm:$0xff]
    %v176 = vld [vmem:[#allocation7 + $0x60] sm:$0xff]
    %v177 = vld [vmem:[#allocation7 + $0x68] sm:$0xff]
    %v178 = vld [vmem:[#allocation7 + $0x70] sm:$0xff]
    %v179 = vld [vmem:[#allocation7 + $0x78] sm:$0xff]
    %v180 = vld [vmem:[%s4] sm:$0x1]
    %v182 = vlaneseq
    %v183 = vshrl.u32 %v182, 7
    %v184 = vsub.s32 0, %v183
    %v185 = vrot.slane %v180, %v184
    %187 = vmatprep.subr.mxu0 0.0
    %188 = vmatpush1.msra.mxu0 %v179
    %189 = vmatprep.subr.mxu0 0.0
    %190 = vmatpush1.msra.mxu0 %v178
    %191 = vmatprep.subr.mxu0 0.0
    %192 = vmatpush1.msra.mxu0 %v177
    %193 = vmatprep.subr.mxu0 0.0
    %194 = vmatpush1.msra.mxu0 %v176
    %195 = vmatprep.subr.mxu0 0.0
    %196 = vmatpush1.msra.mxu0 %v175
    %197 = vmatprep.subr.mxu0 0.0
    %198 = vmatpush1.msra.mxu0 %v174
    %199 = vmatprep.subr.mxu0 0.0
    %200 = vmatpush1.msra.mxu0 %v173
    %201 = vmatprep.subr.mxu0 0.0
    %202 = vmatpush1.msra.mxu0 %v172
    %203 = vmatprep.subr.mxu0 0.0
    %204 = vmatpush1.msra.mxu0 %v171
    %205 = vmatprep.subr.mxu0 0.0
    %206 = vmatpush1.msra.mxu0 %v170
    %207 = vmatprep.subr.mxu0 0.0
    %208 = vmatpush1.msra.mxu0 %v169
    %209 = vmatprep.subr.mxu0 0.0
    %210 = vmatpush1.msra.mxu0 %v168
    %211 = vmatprep.subr.mxu0 0.0
    %212 = vmatpush1.msra.mxu0 %v167
    %213 = vmatprep.subr.mxu0 0.0
    %214 = vmatpush1.msra.mxu0 %v166
    %215 = vmatprep.subr.mxu0 0.0
    %216 = vmatpush1.msra.mxu0 %v165
    %217 = vmatprep.subr.mxu0 0.0
    %218 = vmatpush1.msra.mxu0 %v164
    %219 = vmatprep.subr.mxu0 0.0
    %220 = vmatpush2.msra.mxu0 0.0
    %221 = vmatprep.subr.mxu0 0.0
    %222 = vmatpush2.msra.mxu0 0.0
    %223 = vmatprep.subr.mxu0 0.0
    %224 = vmatpush2.msra.mxu0 0.0
    %225 = vmatprep.subr.mxu0 0.0
    %226 = vmatpush2.msra.mxu0 0.0
    %227 = vmatprep.subr.mxu0 0.0
    %228 = vmatpush2.msra.mxu0 0.0
    %229 = vmatprep.subr.mxu0 0.0
    %230 = vmatpush2.msra.mxu0 0.0
    %231 = vmatprep.subr.mxu0 0.0
    %232 = vmatpush2.msra.mxu0 0.0
    %233 = vmatprep.subr.mxu0 0.0
    %234 = vmatpush2.msra.mxu0 0.0
    %235 = vmatprep.subr.mxu0 0.0
    %236 = vmatpush2.msra.mxu0 0.0
    %237 = vmatprep.subr.mxu0 0.0
    %238 = vmatpush2.msra.mxu0 0.0
    %239 = vmatprep.subr.mxu0 0.0
    %240 = vmatpush2.msra.mxu0 0.0
    %241 = vmatprep.subr.mxu0 0.0
    %242 = vmatpush2.msra.mxu0 0.0
    %243 = vmatprep.subr.mxu0 0.0
    %244 = vmatpush2.msra.mxu0 0.0
    %245 = vmatprep.subr.mxu0 0.0
    %246 = vmatpush2.msra.mxu0 0.0
    %247 = vmatprep.subr.mxu0 0.0
    %248 = vmatpush2.msra.mxu0 0.0
    %249 = vmatprep.subr.mxu0 0.0
    %250 = vmatpush2.msra.mxu0 0.0
    %251 = vmatprep.mubr.f32.mxu0 0.0
    %252 = vmatmul.mubr.f32.gmra.mxu0 %v163
    %v253 = vpop.f32.mrf.mxu0
    %v254 = vadd.f32 %v185, %v253
    %v255 = vpop.f32.mrf.mxu0
    %256 = vdwg.mxu0
    %257 = vxpose.xlu0.b32.start [1/16] %v254, 128
    %258 = vxpose.xlu0.b32.cont [2/16] 0.0, 128
    %259 = vxpose.xlu0.b32.cont [3/16] 0.0, 128
    %260 = vxpose.xlu0.b32.cont [4/16] 0.0, 128
    %261 = vxpose.xlu0.b32.cont [5/16] 0.0, 128
    %262 = vxpose.xlu0.b32.cont [6/16] 0.0, 128
    %263 = vxpose.xlu0.b32.cont [7/16] 0.0, 128
    %264 = vxpose.xlu0.b32.cont [8/16] 0.0, 128
    %265 = vxpose.xlu0.b32.cont [9/16] 0.0, 128
    %266 = vxpose.xlu0.b32.cont [10/16] 0.0, 128
    %267 = vxpose.xlu0.b32.cont [11/16] 0.0, 128
    %268 = vxpose.xlu0.b32.cont [12/16] 0.0, 128
    %269 = vxpose.xlu0.b32.cont [13/16] 0.0, 128
    %270 = vxpose.xlu0.b32.cont [14/16] 0.0, 128
    %271 = vxpose.xlu0.b32.cont [15/16] 0.0, 128
    %272 = vxpose.xlu0.b32.end [16/16] 0.0, 128
    %v273 = vpop.trf.xlu0
    %v274 = vpop.trf.xlu0
    %v275 = vpop.trf.xlu0
    %v276 = vpop.trf.xlu0
    %v277 = vpop.trf.xlu0
    %v278 = vpop.trf.xlu0
    %v279 = vpop.trf.xlu0
    %v280 = vpop.trf.xlu0
    %v281 = vpop.trf.xlu0
    %v282 = vpop.trf.xlu0
    %v283 = vpop.trf.xlu0
    %v284 = vpop.trf.xlu0
    %v285 = vpop.trf.xlu0
    %v286 = vpop.trf.xlu0
    %v287 = vpop.trf.xlu0
    %v288 = vpop.trf.xlu0
    %vm289 = vcmask 64512
    %290 = vst.msk [vmem:[#allocation8] sm:$0xff] %vm289, %v273
    // Predicated region
    $region34: #{tpu_custom_call.1} parent=1 // pred_check
      _
    $region35: #{tpu_custom_call.1} parent=1 // pred_check_branch
      %292 = sbr.rel (0) target = $region37
    $region36: #{tpu_custom_call.1} parent=1 // pred_region
      %s294 = ssub.s32 128, 128
      %295 = vsyncadd [#allocation4], %s294
      %s297 = sshll.u32 [#allocation8], 4
      %s298 = int_to_ptr.vmem [resolvable:$true] %s297
      %300 = dma.vmem_to_hbm [thread:$0]  %s298, 128, %s5, [#allocation4]
    $region37: #{tpu_custom_call.1} parent=1 // pred_fallthru
      _
    // Predicated region
    $region38: #{tpu_custom_call.1} parent=1 // pred_check
      _
    $region39: #{tpu_custom_call.1} parent=1 // pred_check_branch
      %302 = sbr.rel (0) target = $region41
    $region40: #{tpu_custom_call.1} parent=1 // pred_region
      %303 = dma.done [#allocation4], 128
    $region41: #{tpu_custom_call.1} parent=1 // pred_fallthru
      _
    %304 = vsyncpa [#allocation3], 1
    %305 = vsyncpa [#allocation6], 1
    %306 = vsyncpa [#allocation4], 1

</llo_original>
